<compile_context>
chip_gen: v7x
topology: tpu7x:2x2x1
jax: 0.10.0
libtpu: 0.0.40
codegen_flags: <defaults>
</compile_context>

<pallas_src>
import jax
import jax.numpy as jnp
from jax.experimental import pallas as pl
from jax.experimental.pallas import tpu as pltpu

_NEG_SLOPE = 0.2


def _leaky_relu_kernel(x_ref, o_ref):
    x = x_ref[...]
    o_ref[...] = jnp.where(x >= 0, x, x * jnp.asarray(_NEG_SLOPE, dtype=x.dtype))


def leaky_relu_pallas(x, *, target_block_bytes=2 * 1024 * 1024):
    """Elementwise LeakyReLU(negative_slope=0.2) on an arbitrarily-shaped array."""
    orig_shape = x.shape
    dtype = x.dtype
    n = x.size
    if n == 0:
        return x
    if n < 128:
        # Too small to tile lane-densely; a fused XLA select is strictly cheaper.
        return jnp.where(x >= 0, x, x * jnp.asarray(_NEG_SLOPE, dtype=dtype))

    itemsize = jnp.dtype(dtype).itemsize
    # Sublane packing: 8 rows for 4-byte, 16 for 2-byte, 32 for 1-byte dtypes.
    sub = max(8, 32 // itemsize)

    # Pick a lane width (multiple of 128) that divides n so no padding -- and
    # hence no extra whole-array HBM copies -- is needed in the common case.
    cols = None
    for c in (1024, 512, 256, 128):
        if n % c == 0:
            cols = c
            break

    flat = x.reshape(-1)
    if cols is None:
        # Rare ragged case: pad by at most 127 elements to a lane multiple.
        cols = 128
        n_pad = pl.cdiv(n, cols) * cols
        flat = jnp.pad(flat, (0, n_pad - n))
        padded = True
    else:
        n_pad = n
        padded = False

    x2d = flat.reshape(n_pad // cols, cols)
    rows = x2d.shape[0]

    # Block sizing: ~target_block_bytes per (full-width, contiguous) block,
    # rounded to the sublane packing.
    bytes_per_row = cols * itemsize
    target_rows = max(sub, target_block_bytes // bytes_per_row)
    target_rows = max(sub, (target_rows // sub) * sub)
    if rows <= target_rows:
        tile_rows = rows  # single full-array block (block shape == array shape)
    else:
        tile_rows = target_rows
    grid = (pl.cdiv(rows, tile_rows),)

    out2d = pl.pallas_call(
        _leaky_relu_kernel,
        out_shape=jax.ShapeDtypeStruct(x2d.shape, dtype),
        grid_spec=pltpu.PrefetchScalarGridSpec(
            num_scalar_prefetch=0,
            grid=grid,
            in_specs=[pl.BlockSpec((tile_rows, cols), lambda i: (i, 0))],
            out_specs=pl.BlockSpec((tile_rows, cols), lambda i: (i, 0)),
        ),
        compiler_params=pltpu.CompilerParams(
            dimension_semantics=("parallel",),
        ),
    )(x2d)

    if padded:
        return out2d.reshape(-1)[:n].reshape(orig_shape)
    return out2d.reshape(orig_shape)


if __name__ == "__main__":
    key = jax.random.PRNGKey(0)
    # NCHW input consistent with a discriminator activation: (B=2, C=4, H=16, W=16)
    x = jax.random.normal(key, (2, 4, 16, 16), dtype=jnp.float32)

    y = leaky_relu_pallas(x)
    jax.block_until_ready(y)

    # Reference check against plain JAX (exact for f32).
    y_ref = jnp.where(x >= 0, x, 0.2 * x)
    assert y.shape == x.shape and y.dtype == x.dtype
    assert jnp.allclose(y, y_ref, atol=0, rtol=0), "mismatch vs reference"

    print("KERNEL_OK")
</pallas_src>

<mosaic_0001>
module attributes {stable_mosaic.version = 11 : i64} {
  func.func @_leaky_relu_kernel(%arg0: i32, %arg1: memref<2x1024xf32, #tpu.memory_space<vmem>>, %arg2: memref<2x1024xf32, #tpu.memory_space<vmem>>) attributes {dimension_semantics = [#tpu.dimension_semantics<parallel>], iteration_bounds = array<i64: 1>, scalar_prefetch = 0 : i64, scratch_operands = 0 : i64, tpu.core_type = #tpu.core_type<tc>, window_params = [{transform_indices = @transform_0, window_bounds = array<i64: 2, 1024>}, {transform_indices = @transform_1, window_bounds = array<i64: 2, 1024>}]} {
    %c0 = arith.constant 0 : index
    %c0_0 = arith.constant 0 : index
    %0 = vector.load %arg1[%c0, %c0_0] : memref<2x1024xf32, #tpu.memory_space<vmem>>, vector<2x1024xf32>
    %cst = arith.constant 0.000000e+00 : f32
    %1 = vector.broadcast %cst : f32 to vector<2x1024xf32>
    %2 = arith.cmpf oge, %0, %1 : vector<2x1024xf32>
    %cst_1 = arith.constant 2.000000e-01 : f32
    %3 = vector.broadcast %cst_1 : f32 to vector<2x1024xf32>
    %4 = arith.mulf %0, %3 : vector<2x1024xf32>
    %5 = arith.select %2, %0, %4 : vector<2x1024xi1>, vector<2x1024xf32>
    %c0_2 = arith.constant 0 : index
    %c0_3 = arith.constant 0 : index
    %6 = vector.load %arg2[%c0_2, %c0_3] : memref<2x1024xf32, #tpu.memory_space<vmem>>, vector<2x1024xf32>
    tpu.vector_store %arg2[%c0_2, %c0_3], %5 {strides = array<i32>} : memref<2x1024xf32, #tpu.memory_space<vmem>>, vector<2x1024xf32>,
    return
  }
  func.func @transform_0(%arg0: i32) -> (i32, i32) {
    %c0_i32 = arith.constant 0 : i32
    %c0_i32_0 = arith.constant 0 : i32
    return %arg0, %c0_i32 : i32, i32
  }
  func.func @transform_1(%arg0: i32) -> (i32, i32) {
    %c0_i32 = arith.constant 0 : i32
    %c0_i32_0 = arith.constant 0 : i32
    return %arg0, %c0_i32 : i32, i32
  }
}

</mosaic_0001>

<llo_original>
// kernel: tpu_custom_call.1
$region0: #{tpu_custom_call.1}
  #allocation0 [shape = 'u32[]', space=smem, size = 0x4, offset = 0x4, fixed_abs, tag = 'smem constant byte address 0x4 - core index']
  #allocation1 [shape = 'u32[144,128]{1,0:T(1,128)}', space=vmem, size = 0x12000, scoped, tag = 'internal scratch']
  %s0 = inlined_call_operand.hbm [shape: f32[2,1024], index: 0, kind: input, shape index: {}]
  %s1 = inlined_call_operand.hbm [shape: f32[2,1024], index: 1, kind: output, shape index: {}]
  %s2 = sld [smem:[#allocation0]]
  $region18: #{tpu_custom_call.1} parent=0
    _
  %s4 = ssub.s32 1, %s2
  %s5 = scalar_select 0, %s4, %s2
  $region1: #{tpu_custom_call.1} parent=0
    #allocation2 [shape = 'u8[8192]{0}', space=vmem, size = 0x2000, scoped, tag = 'input window, operand 0, single buffered']
    #allocation3 [shape = 's32[1]{0}', space=sflag, size = 0x4, scoped, tag = 'scoped memory for tpu_custom_call.1']
    #allocation4 [shape = 's32[1]{0}', space=sflag, size = 0x4, scoped, tag = 'scoped memory for tpu_custom_call.1']
    #allocation5 [shape = 'u8[8192]{0}', space=vmem, size = 0x2000, scoped, tag = 'output window, operand 0, single buffered']
    %6 = vsyncpa [#allocation3], 0
    %7 = vsyncpa [#allocation4], 0
    // Predicated region
    $region2: #{tpu_custom_call.1} parent=1 // pred_check
      _
    $region3: #{tpu_custom_call.1} parent=1 // pred_check_branch
      %9 = sbr.rel (0) target = $region5
    $region4: #{tpu_custom_call.1} parent=1 // pred_region
      %s11 = ssub.s32 256, 256
      %12 = vsyncadd [#allocation3], %s11
      %s14 = sshll.u32 [#allocation2], 4
      %s15 = int_to_ptr.vmem [resolvable:$true] %s14
      %17 = dma.hbm_to_vmem [thread:$0]  %s0, 256, %s15, [#allocation3]
    $region5: #{tpu_custom_call.1} parent=1 // pred_fallthru
      _
    // Predicated region
    $region6: #{tpu_custom_call.1} parent=1 // pred_check
      _
    $region7: #{tpu_custom_call.1} parent=1 // pred_check_branch
      %19 = sbr.rel (0) target = $region9
    $region8: #{tpu_custom_call.1} parent=1 // pred_region
      %20 = dma.done [#allocation3], 256
    $region9: #{tpu_custom_call.1} parent=1 // pred_fallthru
      _
    %v21 = vld [vmem:[#allocation2] sm:$0xff]
    %v22 = vld [vmem:[#allocation2 + $0x8] sm:$0xff]
    %vm23 = vcmp.ge.f32.partialorder %v21, 0.0
    %vm24 = vcmp.ge.f32.partialorder %v22, 0.0
    %v25 = vmul.f32 %v21, 0.2
    %v26 = vmul.f32 %v22, 0.2
    %v27 = vsel %vm23, %v21, %v25
    %v28 = vsel %vm24, %v22, %v26
    %29 = vst [vmem:[#allocation5] sm:$0xff] %v27
    %30 = vst [vmem:[#allocation5 + $0x8] sm:$0xff] %v28
    // Predicated region
    $region10: #{tpu_custom_call.1} parent=1 // pred_check
      _
    $region11: #{tpu_custom_call.1} parent=1 // pred_check_branch
      %32 = sbr.rel (0) target = $region13
    $region12: #{tpu_custom_call.1} parent=1 // pred_region
      %s34 = ssub.s32 256, 256
      %35 = vsyncadd [#allocation4], %s34
      %s37 = sshll.u32 [#allocation5], 4
      %s38 = int_to_ptr.vmem [resolvable:$true] %s37
      %40 = dma.vmem_to_hbm [thread:$0]  %s38, 256, %s1, [#allocation4]
    $region13: #{tpu_custom_call.1} parent=1 // pred_fallthru
      _
    // Predicated region
    $region14: #{tpu_custom_call.1} parent=1 // pred_check
      _
    $region15: #{tpu_custom_call.1} parent=1 // pred_check_branch
      %42 = sbr.rel (0) target = $region17
    $region16: #{tpu_custom_call.1} parent=1 // pred_region
      %43 = dma.done [#allocation4], 256
    $region17: #{tpu_custom_call.1} parent=1 // pred_fallthru
      _
    %44 = vsyncpa [#allocation3], 1
    %45 = vsyncpa [#allocation4], 1

</llo_original>
